<compile_context>
chip_gen: v5e
topology: v5e:2x2
jax: 0.10.0
libtpu: 0.0.40
codegen_flags: <defaults>
</compile_context>

<pallas_src>
import jax
import jax.numpy as jnp
from jax.experimental import pallas as pl
from jax.experimental.pallas import tpu as pltpu

_LANE = 128
_MIB = 1024 * 1024
_MAX_S_TILE = 4096   # cap per-step minor extent (keeps vector values / compile time sane)
_MAX_N_TILE = 32     # cap static unroll of the per-sample transpose loop


def _round_up(x: int, m: int) -> int:
    return ((x + m - 1) // m) * m


def _vmem_config() -> tuple[int, int]:
    """Generation-aware (pipeline VMEM budget, vmem_limit_bytes)."""
    try:
        info = pltpu.get_tpu_info()
        phys = int(getattr(info, "vmem_capacity_bytes", 128 * _MIB))
    except Exception:
        phys = 128 * _MIB
    if phys >= 96 * _MIB:            # v5e / v6e: 128 MiB physical VMEM
        return 24 * _MIB, 64 * _MIB
    return 16 * _MIB, 44 * _MIB      # v7x: 64 MiB per TensorCore -> keep headroom


def _choose_tiles(n: int, c: int, s: int, itemsize: int, budget: int):
    """Pick (n_tile, c_tile, s_tile) for the per-sample (C, S) -> (S, C) transpose."""
    # Sub-32-bit dtypes pack along sublanes: f32 -> 8, bf16 -> 16, int8/fp8 -> 32.
    sublane = max(8, 32 // max(itemsize, 1))

    def s_tile_budget(c_t: int) -> int:
        # Padded VMEM bytes contributed per spatial element:
        #   input tile  (c_t, s_t): channel rows padded to a sublane multiple
        #   output tile (s_t, c_t): channel cols padded to 128 lanes
        per_s = (_round_up(c_t, sublane) + _round_up(c_t, _LANE)) * itemsize
        return budget // (2 * per_s)            # x2: double-buffered pipeline

    def padded_sample_bytes(c_t: int, s_t: int) -> int:
        inp = _round_up(c_t, sublane) * _round_up(s_t, _LANE)
        out = _round_up(s_t, sublane) * _round_up(c_t, _LANE)
        return (inp + out) * itemsize

    # Channel tile: prefer the full C (one contiguous HBM write range per output
    # block, no channel grid axis).  Only split when C is so large that the budget
    # would force the spatial tile below ~512.
    c_tile = c
    if s_tile_budget(c) < 512 and c > _LANE and c % _LANE == 0:
        c_tile = _LANE
        for k in range(c // _LANE, 0, -1):
            cand = k * _LANE
            if c % cand == 0 and s_tile_budget(cand) >= 512:
                c_tile = cand
                break

    # Spatial tile: lane/sublane aligned for any dtype, or the full extent.
    if s <= _LANE:
        s_tile = s
    else:
        s_tile = min(max(s_tile_budget(c_tile), _LANE), s, _MAX_S_TILE)
        s_tile = max(_LANE, (s_tile // _LANE) * _LANE)

    # Batch tile: when one sample fits in a single (C, S) tile, batch several
    # samples per grid step so tiny images are not fixed-step-overhead bound.
    n_tile = 1
    if n > 1 and c_tile == c and s_tile == s:
        fit = budget // (2 * max(padded_sample_bytes(c, s), 1))
        n_tile = max(1, min(n, fit, _MAX_N_TILE))
        while n % n_tile:            # keep leading-dim blocks exact (no masking needed)
            n_tile -= 1

    return n_tile, c_tile, s_tile


def _nchw_to_nhwc_kernel(x_ref, o_ref):
    # x_ref: (n_tile, c_tile, s_tile) tile of the (N, C, H*W) input view.
    # o_ref: (n_tile, s_tile, c_tile) tile of the (N, H*W, C) output view.
    # Per-sample 2-D (C, S) -> (S, C) swap: the canonical XLU transpose.
    for i in range(x_ref.shape[0]):          # small static unroll (<= _MAX_N_TILE)
        o_ref[i] = x_ref[i].T


def to_channels_last(x: jax.Array) -> jax.Array:
    """NCHW -> NHWC via a Pallas TPU kernel. Matches torch permute(0, 2, 3, 1)."""
    n, c, h, w = x.shape
    s = h * w
    itemsize = jnp.dtype(x.dtype).itemsize
    budget, vmem_limit = _vmem_config()
    n_tile, c_tile, s_tile = _choose_tiles(n, c, s, itemsize, budget)

    x3 = x.reshape(n, c, s)                  # free view of contiguous NCHW

    # Spatial tiles lead the grid: the largest parallel axis gets split across
    # v7x's two TensorCores even at batch=1 (neutral on single-TC v5e/v6e).
    grid = (pl.cdiv(s, s_tile), pl.cdiv(n, n_tile), pl.cdiv(c, c_tile))

    out3 = pl.pallas_call(
        _nchw_to_nhwc_kernel,
        out_shape=jax.ShapeDtypeStruct((n, s, c), x.dtype),
        grid_spec=pltpu.PrefetchScalarGridSpec(
            num_scalar_prefetch=0,
            grid=grid,
            in_specs=[
                pl.BlockSpec(
                    (n_tile, c_tile, s_tile),
                    lambda si, ni, ci: (ni, ci, si),
                ),
            ],
            out_specs=pl.BlockSpec(
                (n_tile, s_tile, c_tile),
                lambda si, ni, ci: (ni, si, ci),
            ),
        ),
        compiler_params=pltpu.CompilerParams(
            dimension_semantics=("parallel", "parallel", "parallel"),
            vmem_limit_bytes=vmem_limit,
        ),
        cost_estimate=pl.CostEstimate(
            flops=0,
            transcendentals=0,
            bytes_accessed=2 * n * c * s * itemsize,   # pure-bandwidth op
        ),
    )(x3)

    return out3.reshape(n, h, w, c)          # free view: (N, S, C) == NHWC


if __name__ == "__main__":
    key = jax.random.PRNGKey(0)

    # Small NCHW input consistent with the module: batch=2, channels=4, 16x16.
    x = jax.random.normal(key, (2, 4, 16, 16), dtype=jnp.float32)
    out = jax.block_until_ready(to_channels_last(x))
    ref = jnp.transpose(x, (0, 2, 3, 1))
    assert out.shape == (2, 16, 16, 4), out.shape
    assert out.dtype == x.dtype
    assert jnp.array_equal(out, ref), "mismatch vs reference permute"

    # RGB-style stem input (odd channel count, tiny spatial): full-extent tile path.
    x2 = jax.random.normal(jax.random.PRNGKey(1), (1, 3, 8, 8), dtype=jnp.float32)
    out2 = jax.block_until_ready(to_channels_last(x2))
    assert jnp.array_equal(out2, jnp.transpose(x2, (0, 2, 3, 1)))

    # Non-128-aligned spatial extent: exercises multi-step grid + remainder masking.
    x3 = jax.random.normal(jax.random.PRNGKey(2), (2, 4, 20, 20), dtype=jnp.float32)
    out3 = jax.block_until_ready(to_channels_last(x3))
    assert jnp.array_equal(out3, jnp.transpose(x3, (0, 2, 3, 1)))

    print("KERNEL_OK")
</pallas_src>

<mosaic_0001>
module attributes {stable_mosaic.version = 11 : i64} {
  func.func @_nchw_to_nhwc_kernel(%arg0: i32, %arg1: i32, %arg2: i32, %arg3: memref<2x4x256xf32, #tpu.memory_space<vmem>>, %arg4: memref<2x256x4xf32, #tpu.memory_space<vmem>>) attributes {dimension_semantics = [#tpu.dimension_semantics<parallel>, #tpu.dimension_semantics<parallel>, #tpu.dimension_semantics<parallel>], iteration_bounds = array<i64: 1, 1, 1>, scalar_prefetch = 0 : i64, scratch_operands = 0 : i64, tpu.core_type = #tpu.core_type<tc>, window_params = [{transform_indices = @transform_0, window_bounds = array<i64: 2, 4, 256>}, {transform_indices = @transform_1, window_bounds = array<i64: 2, 256, 4>}]} {
    %c0 = arith.constant 0 : index
    %c0_0 = arith.constant 0 : index
    %c0_1 = arith.constant 0 : index
    %0 = vector.load %arg3[%c0, %c0_0, %c0_1] : memref<2x4x256xf32, #tpu.memory_space<vmem>>, vector<1x4x256xf32>
    %1 = vector.shape_cast %0 : vector<1x4x256xf32> to vector<4x256xf32>
    %2 = tpu.transpose %1, [1, 0] : vector<4x256xf32> -> vector<256x4xf32>
    %c0_2 = arith.constant 0 : index
    %c0_3 = arith.constant 0 : index
    %c0_4 = arith.constant 0 : index
    %3 = vector.load %arg4[%c0_2, %c0_3, %c0_4] : memref<2x256x4xf32, #tpu.memory_space<vmem>>, vector<1x256x4xf32>
    %4 = vector.shape_cast %3 : vector<1x256x4xf32> to vector<256x4xf32>
    %5 = vector.shape_cast %2 : vector<256x4xf32> to vector<1x256x4xf32>
    tpu.vector_store %arg4[%c0_2, %c0_3, %c0_4], %5 {strides = array<i32>} : memref<2x256x4xf32, #tpu.memory_space<vmem>>, vector<1x256x4xf32>,
    %c1 = arith.constant 1 : index
    %c0_5 = arith.constant 0 : index
    %c0_6 = arith.constant 0 : index
    %6 = vector.load %arg3[%c1, %c0_5, %c0_6] : memref<2x4x256xf32, #tpu.memory_space<vmem>>, vector<1x4x256xf32>
    %7 = vector.shape_cast %6 : vector<1x4x256xf32> to vector<4x256xf32>
    %8 = tpu.transpose %7, [1, 0] : vector<4x256xf32> -> vector<256x4xf32>
    %c1_7 = arith.constant 1 : index
    %c0_8 = arith.constant 0 : index
    %c0_9 = arith.constant 0 : index
    %9 = vector.load %arg4[%c1_7, %c0_8, %c0_9] : memref<2x256x4xf32, #tpu.memory_space<vmem>>, vector<1x256x4xf32>
    %10 = vector.shape_cast %9 : vector<1x256x4xf32> to vector<256x4xf32>
    %11 = vector.shape_cast %8 : vector<256x4xf32> to vector<1x256x4xf32>
    tpu.vector_store %arg4[%c1_7, %c0_8, %c0_9], %11 {strides = array<i32>} : memref<2x256x4xf32, #tpu.memory_space<vmem>>, vector<1x256x4xf32>,
    return
  }
  func.func @transform_0(%arg0: i32, %arg1: i32, %arg2: i32) -> (i32, i32, i32) {
    %c0_i32 = arith.constant 0 : i32
    return %arg1, %arg2, %arg0 : i32, i32, i32
  }
  func.func @transform_1(%arg0: i32, %arg1: i32, %arg2: i32) -> (i32, i32, i32) {
    %c0_i32 = arith.constant 0 : i32
    return %arg1, %arg0, %arg2 : i32, i32, i32
  }
}

</mosaic_0001>

<llo_original>
// kernel: tpu_custom_call.1
$region0: #{tpu_custom_call.1}
  #allocation0 [shape = 'u32[]', space=smem, size = 0x4, offset = 0x4, fixed_abs, tag = 'smem constant byte address 0x4 - core index']
  #allocation1 [shape = 'u32[72,128]{1,0:T(1,128)}', space=vmem, size = 0x9000, scoped, tag = 'internal scratch']
  %s0 = inlined_call_operand.hbm [shape: f32[2,4,256], index: 0, kind: input, shape index: {}]
  %s1 = inlined_call_operand.vmem [shape: f32[2,256,4], index: 1, kind: output, shape index: {}]
  %s2 = sld [smem:[#allocation0]]
  $region18: #{tpu_custom_call.1} parent=0
    _
  %s4 = ssub.s32 1, %s2
  %s5 = scalar_select 0, %s4, %s2
  $region1: #{tpu_custom_call.1} parent=0
    #allocation2 [shape = 'u8[8192]{0}', space=vmem, size = 0x2000, scoped, tag = 'input window, operand 0, single buffered']
    #allocation3 [shape = 's32[1]{0}', space=sflag, size = 0x4, scoped, tag = 'scoped memory for tpu_custom_call.1']
    %6 = vsyncpa [#allocation3], 0
    // Predicated region
    $region2: #{tpu_custom_call.1} parent=1 // pred_check
      _
    $region3: #{tpu_custom_call.1} parent=1 // pred_check_branch
      %8 = sbr.rel (0) target = $region5
    $region4: #{tpu_custom_call.1} parent=1 // pred_region
      %10 = vsyncadd [#allocation3], 0
      %s11 = sshll.u32 %s0, 4
      %s12 = int_to_ptr.hbm [resolvable:$true] %s11
      %s13 = sshll.u32 [#allocation2], 4
      %s14 = int_to_ptr.vmem [resolvable:$true] %s13
      %19 = dma.hbm_to_vmem [thread:$0]  %s12, 256, %s14, [#allocation3], 128, 128, 8
    $region5: #{tpu_custom_call.1} parent=1 // pred_fallthru
      _
    // Predicated region
    $region6: #{tpu_custom_call.1} parent=1 // pred_check
      _
    $region7: #{tpu_custom_call.1} parent=1 // pred_check_branch
      %21 = sbr.rel (0) target = $region9
    $region8: #{tpu_custom_call.1} parent=1 // pred_region
      %23 = dma.done [#allocation3], 256
    $region9: #{tpu_custom_call.1} parent=1 // pred_fallthru
      _
    %v24 = vld [vmem:[#allocation2] sm:$0xff]
    %26 = vst [vmem:[#allocation1] ss:$2 sm:$0xff] %v24
    %v27 = vld.sshfl [vmem:[#allocation1] sm:$0xff pattern:$0x75316420]
    %v28 = vld.sshfl [vmem:[#allocation1 + $0x8] sm:$0xff pattern:$0x75316420]
    %31 = vxpose.xlu0.b32.start [1/16] %v27, 128
    %32 = vxpose.xlu0.b32.cont [2/16] 0.0, 128
    %33 = vxpose.xlu0.b32.cont [3/16] 0.0, 128
    %34 = vxpose.xlu0.b32.cont [4/16] 0.0, 128
    %35 = vxpose.xlu0.b32.cont [5/16] 0.0, 128
    %36 = vxpose.xlu0.b32.cont [6/16] 0.0, 128
    %37 = vxpose.xlu0.b32.cont [7/16] 0.0, 128
    %38 = vxpose.xlu0.b32.cont [8/16] 0.0, 128
    %39 = vxpose.xlu0.b32.cont [9/16] 0.0, 128
    %40 = vxpose.xlu0.b32.cont [10/16] 0.0, 128
    %41 = vxpose.xlu0.b32.cont [11/16] 0.0, 128
    %42 = vxpose.xlu0.b32.cont [12/16] 0.0, 128
    %43 = vxpose.xlu0.b32.cont [13/16] 0.0, 128
    %44 = vxpose.xlu0.b32.cont [14/16] 0.0, 128
    %45 = vxpose.xlu0.b32.cont [15/16] 0.0, 128
    %46 = vxpose.xlu0.b32.end [16/16] 0.0, 128
    %v47 = vpop.trf.xlu0
    %v48 = vpop.trf.xlu0
    %v49 = vpop.trf.xlu0
    %v50 = vpop.trf.xlu0
    %v51 = vpop.trf.xlu0
    %v52 = vpop.trf.xlu0
    %v53 = vpop.trf.xlu0
    %v54 = vpop.trf.xlu0
    %v55 = vpop.trf.xlu0
    %v56 = vpop.trf.xlu0
    %v57 = vpop.trf.xlu0
    %v58 = vpop.trf.xlu0
    %v59 = vpop.trf.xlu0
    %v60 = vpop.trf.xlu0
    %v61 = vpop.trf.xlu0
    %v62 = vpop.trf.xlu0
    %63 = vxpose.xlu0.b32.start [1/16] %v28, 128
    %64 = vxpose.xlu0.b32.cont [2/16] 0.0, 128
    %65 = vxpose.xlu0.b32.cont [3/16] 0.0, 128
    %66 = vxpose.xlu0.b32.cont [4/16] 0.0, 128
    %67 = vxpose.xlu0.b32.cont [5/16] 0.0, 128
    %68 = vxpose.xlu0.b32.cont [6/16] 0.0, 128
    %69 = vxpose.xlu0.b32.cont [7/16] 0.0, 128
    %70 = vxpose.xlu0.b32.cont [8/16] 0.0, 128
    %71 = vxpose.xlu0.b32.cont [9/16] 0.0, 128
    %72 = vxpose.xlu0.b32.cont [10/16] 0.0, 128
    %73 = vxpose.xlu0.b32.cont [11/16] 0.0, 128
    %74 = vxpose.xlu0.b32.cont [12/16] 0.0, 128
    %75 = vxpose.xlu0.b32.cont [13/16] 0.0, 128
    %76 = vxpose.xlu0.b32.cont [14/16] 0.0, 128
    %77 = vxpose.xlu0.b32.cont [15/16] 0.0, 128
    %78 = vxpose.xlu0.b32.end [16/16] 0.0, 128
    %v79 = vpop.trf.xlu0
    %v80 = vpop.trf.xlu0
    %v81 = vpop.trf.xlu0
    %v82 = vpop.trf.xlu0
    %v83 = vpop.trf.xlu0
    %v84 = vpop.trf.xlu0
    %v85 = vpop.trf.xlu0
    %v86 = vpop.trf.xlu0
    %v87 = vpop.trf.xlu0
    %v88 = vpop.trf.xlu0
    %v89 = vpop.trf.xlu0
    %v90 = vpop.trf.xlu0
    %v91 = vpop.trf.xlu0
    %v92 = vpop.trf.xlu0
    %v93 = vpop.trf.xlu0
    %v94 = vpop.trf.xlu0
    %vm95 = vcmask 31744
    %96 = vst.msk [vmem:[%s1] sm:$0xff] %vm95, %v47
    %97 = vst.msk [vmem:[%s1 + $0x8] sm:$0xff] %vm95, %v48
    %98 = vst.msk [vmem:[%s1 + $0x10] sm:$0xff] %vm95, %v49
    %99 = vst.msk [vmem:[%s1 + $0x18] sm:$0xff] %vm95, %v50
    %100 = vst.msk [vmem:[%s1 + $0x20] sm:$0xff] %vm95, %v51
    %101 = vst.msk [vmem:[%s1 + $0x28] sm:$0xff] %vm95, %v52
    %102 = vst.msk [vmem:[%s1 + $0x30] sm:$0xff] %vm95, %v53
    %103 = vst.msk [vmem:[%s1 + $0x38] sm:$0xff] %vm95, %v54
    %104 = vst.msk [vmem:[%s1 + $0x40] sm:$0xff] %vm95, %v55
    %105 = vst.msk [vmem:[%s1 + $0x48] sm:$0xff] %vm95, %v56
    %106 = vst.msk [vmem:[%s1 + $0x50] sm:$0xff] %vm95, %v57
    %107 = vst.msk [vmem:[%s1 + $0x58] sm:$0xff] %vm95, %v58
    %108 = vst.msk [vmem:[%s1 + $0x60] sm:$0xff] %vm95, %v59
    %109 = vst.msk [vmem:[%s1 + $0x68] sm:$0xff] %vm95, %v60
    %110 = vst.msk [vmem:[%s1 + $0x70] sm:$0xff] %vm95, %v61
    %111 = vst.msk [vmem:[%s1 + $0x78] sm:$0xff] %vm95, %v62
    %112 = vst.msk [vmem:[%s1 + $0x80] sm:$0xff] %vm95, %v79
    %113 = vst.msk [vmem:[%s1 + $0x88] sm:$0xff] %vm95, %v80
    %114 = vst.msk [vmem:[%s1 + $0x90] sm:$0xff] %vm95, %v81
    %115 = vst.msk [vmem:[%s1 + $0x98] sm:$0xff] %vm95, %v82
    %116 = vst.msk [vmem:[%s1 + $0xa0] sm:$0xff] %vm95, %v83
    %117 = vst.msk [vmem:[%s1 + $0xa8] sm:$0xff] %vm95, %v84
    %118 = vst.msk [vmem:[%s1 + $0xb0] sm:$0xff] %vm95, %v85
    %119 = vst.msk [vmem:[%s1 + $0xb8] sm:$0xff] %vm95, %v86
    %120 = vst.msk [vmem:[%s1 + $0xc0] sm:$0xff] %vm95, %v87
    %121 = vst.msk [vmem:[%s1 + $0xc8] sm:$0xff] %vm95, %v88
    %122 = vst.msk [vmem:[%s1 + $0xd0] sm:$0xff] %vm95, %v89
    %123 = vst.msk [vmem:[%s1 + $0xd8] sm:$0xff] %vm95, %v90
    %124 = vst.msk [vmem:[%s1 + $0xe0] sm:$0xff] %vm95, %v91
    %125 = vst.msk [vmem:[%s1 + $0xe8] sm:$0xff] %vm95, %v92
    %126 = vst.msk [vmem:[%s1 + $0xf0] sm:$0xff] %vm95, %v93
    %127 = vst.msk [vmem:[%s1 + $0xf8] sm:$0xff] %vm95, %v94
    %s128 = scalar_lea.vmem [#allocation2], 8
    %v129 = vld [vmem:[%s128] sm:$0xff]
    %131 = vst [vmem:[#allocation1] ss:$2 sm:$0xff] %v129
    %v132 = vld.sshfl [vmem:[#allocation1] sm:$0xff pattern:$0x75316420]
    %v133 = vld.sshfl [vmem:[#allocation1 + $0x8] sm:$0xff pattern:$0x75316420]
    %136 = vxpose.xlu0.b32.start [1/16] %v132, 128
    %137 = vxpose.xlu0.b32.cont [2/16] 0.0, 128
    %138 = vxpose.xlu0.b32.cont [3/16] 0.0, 128
    %139 = vxpose.xlu0.b32.cont [4/16] 0.0, 128
    %140 = vxpose.xlu0.b32.cont [5/16] 0.0, 128
    %141 = vxpose.xlu0.b32.cont [6/16] 0.0, 128
    %142 = vxpose.xlu0.b32.cont [7/16] 0.0, 128
    %143 = vxpose.xlu0.b32.cont [8/16] 0.0, 128
    %144 = vxpose.xlu0.b32.cont [9/16] 0.0, 128
    %145 = vxpose.xlu0.b32.cont [10/16] 0.0, 128
    %146 = vxpose.xlu0.b32.cont [11/16] 0.0, 128
    %147 = vxpose.xlu0.b32.cont [12/16] 0.0, 128
    %148 = vxpose.xlu0.b32.cont [13/16] 0.0, 128
    %149 = vxpose.xlu0.b32.cont [14/16] 0.0, 128
    %150 = vxpose.xlu0.b32.cont [15/16] 0.0, 128
    %151 = vxpose.xlu0.b32.end [16/16] 0.0, 128
    %v152 = vpop.trf.xlu0
    %v153 = vpop.trf.xlu0
    %v154 = vpop.trf.xlu0
    %v155 = vpop.trf.xlu0
    %v156 = vpop.trf.xlu0
    %v157 = vpop.trf.xlu0
    %v158 = vpop.trf.xlu0
    %v159 = vpop.trf.xlu0
    %v160 = vpop.trf.xlu0
    %v161 = vpop.trf.xlu0
    %v162 = vpop.trf.xlu0
    %v163 = vpop.trf.xlu0
    %v164 = vpop.trf.xlu0
    %v165 = vpop.trf.xlu0
    %v166 = vpop.trf.xlu0
    %v167 = vpop.trf.xlu0
    %168 = vxpose.xlu0.b32.start [1/16] %v133, 128
    %169 = vxpose.xlu0.b32.cont [2/16] 0.0, 128
    %170 = vxpose.xlu0.b32.cont [3/16] 0.0, 128
    %171 = vxpose.xlu0.b32.cont [4/16] 0.0, 128
    %172 = vxpose.xlu0.b32.cont [5/16] 0.0, 128
    %173 = vxpose.xlu0.b32.cont [6/16] 0.0, 128
    %174 = vxpose.xlu0.b32.cont [7/16] 0.0, 128
    %175 = vxpose.xlu0.b32.cont [8/16] 0.0, 128
    %176 = vxpose.xlu0.b32.cont [9/16] 0.0, 128
    %177 = vxpose.xlu0.b32.cont [10/16] 0.0, 128
    %178 = vxpose.xlu0.b32.cont [11/16] 0.0, 128
    %179 = vxpose.xlu0.b32.cont [12/16] 0.0, 128
    %180 = vxpose.xlu0.b32.cont [13/16] 0.0, 128
    %181 = vxpose.xlu0.b32.cont [14/16] 0.0, 128
    %182 = vxpose.xlu0.b32.cont [15/16] 0.0, 128
    %183 = vxpose.xlu0.b32.end [16/16] 0.0, 128
    %v184 = vpop.trf.xlu0
    %v185 = vpop.trf.xlu0
    %v186 = vpop.trf.xlu0
    %v187 = vpop.trf.xlu0
    %v188 = vpop.trf.xlu0
    %v189 = vpop.trf.xlu0
    %v190 = vpop.trf.xlu0
    %v191 = vpop.trf.xlu0
    %v192 = vpop.trf.xlu0
    %v193 = vpop.trf.xlu0
    %v194 = vpop.trf.xlu0
    %v195 = vpop.trf.xlu0
    %v196 = vpop.trf.xlu0
    %v197 = vpop.trf.xlu0
    %v198 = vpop.trf.xlu0
    %v199 = vpop.trf.xlu0
    %s200 = scalar_lea.vmem %s1, 256
    %201 = vst.msk [vmem:[%s200] sm:$0xff] %vm95, %v152
    %202 = vst.msk [vmem:[%s200 + $0x8] sm:$0xff] %vm95, %v153
    %203 = vst.msk [vmem:[%s200 + $0x10] sm:$0xff] %vm95, %v154
    %204 = vst.msk [vmem:[%s200 + $0x18] sm:$0xff] %vm95, %v155
    %205 = vst.msk [vmem:[%s200 + $0x20] sm:$0xff] %vm95, %v156
    %206 = vst.msk [vmem:[%s200 + $0x28] sm:$0xff] %vm95, %v157
    %207 = vst.msk [vmem:[%s200 + $0x30] sm:$0xff] %vm95, %v158
    %208 = vst.msk [vmem:[%s200 + $0x38] sm:$0xff] %vm95, %v159
    %209 = vst.msk [vmem:[%s200 + $0x40] sm:$0xff] %vm95, %v160
    %210 = vst.msk [vmem:[%s200 + $0x48] sm:$0xff] %vm95, %v161
    %211 = vst.msk [vmem:[%s200 + $0x50] sm:$0xff] %vm95, %v162
    %212 = vst.msk [vmem:[%s200 + $0x58] sm:$0xff] %vm95, %v163
    %213 = vst.msk [vmem:[%s200 + $0x60] sm:$0xff] %vm95, %v164
    %214 = vst.msk [vmem:[%s200 + $0x68] sm:$0xff] %vm95, %v165
    %215 = vst.msk [vmem:[%s200 + $0x70] sm:$0xff] %vm95, %v166
    %216 = vst.msk [vmem:[%s200 + $0x78] sm:$0xff] %vm95, %v167
    %217 = vst.msk [vmem:[%s200 + $0x80] sm:$0xff] %vm95, %v184
    %218 = vst.msk [vmem:[%s200 + $0x88] sm:$0xff] %vm95, %v185
    %219 = vst.msk [vmem:[%s200 + $0x90] sm:$0xff] %vm95, %v186
    %220 = vst.msk [vmem:[%s200 + $0x98] sm:$0xff] %vm95, %v187
    %221 = vst.msk [vmem:[%s200 + $0xa0] sm:$0xff] %vm95, %v188
    %222 = vst.msk [vmem:[%s200 + $0xa8] sm:$0xff] %vm95, %v189
    %223 = vst.msk [vmem:[%s200 + $0xb0] sm:$0xff] %vm95, %v190
    %224 = vst.msk [vmem:[%s200 + $0xb8] sm:$0xff] %vm95, %v191
    %225 = vst.msk [vmem:[%s200 + $0xc0] sm:$0xff] %vm95, %v192
    %226 = vst.msk [vmem:[%s200 + $0xc8] sm:$0xff] %vm95, %v193
    %227 = vst.msk [vmem:[%s200 + $0xd0] sm:$0xff] %vm95, %v194
    %228 = vst.msk [vmem:[%s200 + $0xd8] sm:$0xff] %vm95, %v195
    %229 = vst.msk [vmem:[%s200 + $0xe0] sm:$0xff] %vm95, %v196
    %230 = vst.msk [vmem:[%s200 + $0xe8] sm:$0xff] %vm95, %v197
    %231 = vst.msk [vmem:[%s200 + $0xf0] sm:$0xff] %vm95, %v198
    %232 = vst.msk [vmem:[%s200 + $0xf8] sm:$0xff] %vm95, %v199
    // Predicated region
    $region10: #{tpu_custom_call.1} parent=1 // pred_check
      _
    $region11: #{tpu_custom_call.1} parent=1 // pred_check_branch
      %234 = sbr.rel (0) target = $region13
    $region12: #{tpu_custom_call.1} parent=1 // pred_region
      _
    $region13: #{tpu_custom_call.1} parent=1 // pred_fallthru
      _
    // Predicated region
    $region14: #{tpu_custom_call.1} parent=1 // pred_check
      _
    $region15: #{tpu_custom_call.1} parent=1 // pred_check_branch
      %236 = sbr.rel (0) target = $region17
    $region16: #{tpu_custom_call.1} parent=1 // pred_region
      _
    $region17: #{tpu_custom_call.1} parent=1 // pred_fallthru
      _
    %237 = vsyncpa [#allocation3], 1

</llo_original>
